<compile_context>
chip_gen: v7x
topology: tpu7x:2x2x1
jax: 0.10.0
libtpu: 0.0.40
codegen_flags: <defaults>
</compile_context>

<pallas_src>
import functools

import numpy as np
import jax
import jax.numpy as jnp
from jax.experimental import pallas as pl
from jax.experimental.pallas import tpu as pltpu


# ----------------------------------------------------------------------------
# Parameter construction (deterministic, mirrors CompactBilinearPooling.__init__)
# ----------------------------------------------------------------------------
def generate_sketch_matrix(rand_h, rand_s, output_dim):
    input_dim = len(rand_h)
    m = np.zeros((input_dim, output_dim), dtype=np.float64)
    m[np.arange(input_dim), rand_h] = rand_s.astype(np.float64)
    return m


def make_cbp_params(input_dim1, input_dim2, output_dim):
    """Precompute fused (count-sketch @ DFT) weights.

    Returns:
      w1:     (C1, 2D) bf16   b1 @ w1 = [Re(FFT(sketch1)) | Im(FFT(sketch1))]
      w2:     (C2, 2D) bf16   likewise for input 2
      w_cos:  (D, D)  bf16    cos(2*pi*k*n/D)
      w_msin: (D, D)  bf16    -sin(2*pi*k*n/D)
              (P_re @ w_cos + P_im @ w_msin = D * Re(IFFT(P)); the *D of the
               reference cancels the 1/D of ifft, so no extra factor.)
      s1,s2:  raw f32 sketch matrices — only used by the FFT reference.
    """
    np.random.seed(1)
    rand_h_1 = np.random.randint(output_dim, size=input_dim1)
    np.random.seed(3)
    rand_s_1 = 2 * np.random.randint(2, size=input_dim1) - 1
    np.random.seed(5)
    rand_h_2 = np.random.randint(output_dim, size=input_dim2)
    np.random.seed(7)
    rand_s_2 = 2 * np.random.randint(2, size=input_dim2) - 1
    s1 = generate_sketch_matrix(rand_h_1, rand_s_1, output_dim)
    s2 = generate_sketch_matrix(rand_h_2, rand_s_2, output_dim)

    n = np.arange(output_dim)
    ang = 2.0 * np.pi * np.outer(n, n) / float(output_dim)
    cos_m = np.cos(ang)
    sin_m = np.sin(ang)

    # Forward DFT: X_k = x@cos - i*(x@sin)  ->  [re | im] = x @ [cos | -sin]
    fwd = np.concatenate([cos_m, -sin_m], axis=1)                  # (D, 2D)

    # bf16 MXU operands (native rate on v5e/v6e/v7x); accumulation stays f32
    # inside the kernel via preferred_element_type.  bf16 also halves the
    # resident (double-buffered) weight footprint, which matters on v7x when D
    # grows (w_cos/w_msin are D^2-sized).
    w1 = jnp.asarray((s1 @ fwd).astype(np.float32)).astype(jnp.bfloat16)      # (C1, 2D)
    w2 = jnp.asarray((s2 @ fwd).astype(np.float32)).astype(jnp.bfloat16)      # (C2, 2D)
    w_cos = jnp.asarray(cos_m.astype(np.float32)).astype(jnp.bfloat16)        # (D, D)
    w_msin = jnp.asarray((-sin_m).astype(np.float32)).astype(jnp.bfloat16)    # (D, D)

    return (w1, w2, w_cos, w_msin,
            jnp.asarray(s1.astype(np.float32)), jnp.asarray(s2.astype(np.float32)))


# ----------------------------------------------------------------------------
# Pallas kernel: one grid step per BT-batch tile
# ----------------------------------------------------------------------------
def bilinear_pooling_kernel(b1_ref, b2_ref, w1_ref, w2_ref, wcos_ref, wmsin_ref,
                            o_ref, *, bt, hw):
    D = o_ref.shape[-1]

    # Fused count-sketch + forward DFT: one wide (N = 2D) bf16 MXU matmul per
    # input, f32 accumulation.  Lane layout of the result is [Re | Im].
    f1 = jnp.dot(b1_ref[...], w1_ref[...], preferred_element_type=jnp.float32)  # (bt*hw, 2D)
    f2 = jnp.dot(b2_ref[...], w2_ref[...], preferred_element_type=jnp.float32)  # (bt*hw, 2D)

    re1, im1 = f1[:, :D], f1[:, D:]   # 128-aligned lane slices (free views)
    re2, im2 = f2[:, :D], f2[:, D:]

    # Complex elementwise product (VPU, f32).
    p_real = re1 * re2 - im1 * im2
    p_imag = re1 * im2 + im1 * re2

    # Spatial sum-pool per batch element: sublane-axis reduction (XLU slot).
    # hw is a multiple of 8, so the reshape is a relayout-free view; this
    # replaces the old 87.5%-zero block-diagonal pooling matmul and its DMA.
    pooled_re = jnp.sum(p_real.reshape(bt, hw, D), axis=1)   # (bt, D)
    pooled_im = jnp.sum(p_imag.reshape(bt, hw, D), axis=1)   # (bt, D)

    # Inverse DFT (real part; the *output_dim factor of the reference is
    # folded in), applied AFTER pooling and split into cos / -sin halves so no
    # (bt*hw, 2D) concat copy is ever materialized.
    pooled = (jnp.dot(pooled_re.astype(jnp.bfloat16), wcos_ref[...],
                      preferred_element_type=jnp.float32)
              + jnp.dot(pooled_im.astype(jnp.bfloat16), wmsin_ref[...],
                        preferred_element_type=jnp.float32))                  # (bt, D)

    # F.normalize(dim=1): x / max(||x||_2, 1e-12)  ==  x * rsqrt(max(sumsq, 1e-24))
    # Clamp keeps padded all-zero rows at 0 (no inf/NaN); rsqrt runs on the EUP.
    sumsq = jnp.sum(pooled * pooled, axis=1, keepdims=True)
    o_ref[...] = pooled * jax.lax.rsqrt(jnp.maximum(sumsq, 1e-24))


def _choose_bt(batch, hw):
    """Batch-tile size: a multiple of 8 (dense (8,128) output tiles).

    Prefer bigger tiles when the batch is large (amortizes per-step overhead),
    but only when that still leaves >= 2 grid steps (so both v7x TensorCores
    get real work) and the f32 intermediates (~BT*HW*2D) stay small in VMEM.
    """
    for bt in (64, 32, 16):
        if batch >= 2 * bt and bt * hw <= 512:
            return bt
    return 8


def bilinear_pooling(input1, input2, w1, w2, w_cos, w_msin):
    """input1: [B, C1, H, W], input2: [B, C2, H, W] (NCHW, like PyTorch)."""
    B, C1, H, W = input1.shape
    _, C2, _, _ = input2.shape
    D = w_cos.shape[0]
    HW = H * W

    BT = _choose_bt(B, HW)
    B_pad = ((B + BT - 1) // BT) * BT

    # NCHW -> NHWC -> [B, HW, C]; pad batch to a multiple of BT; flatten so the
    # kernel sees lane-dense 2-D bf16 operands of shape (BT*HW, C) per grid
    # step.  (Keeping the transpose in the wrapper avoids an in-kernel XLU
    # transpose; padded rows are zeros and get sliced away at the end.)
    def prep(x, C):
        x = jnp.transpose(x, (0, 2, 3, 1)).reshape(B, HW, C)
        if B_pad != B:
            x = jnp.pad(x, ((0, B_pad - B), (0, 0), (0, 0)))
        return x.reshape(B_pad * HW, C).astype(jnp.bfloat16)

    b1 = prep(input1, C1)
    b2 = prep(input2, C2)

    m_total = B_pad * HW
    cost = pl.CostEstimate(
        flops=int(2 * m_total * (C1 + C2) * 2 * D      # fused sketch + DFT matmuls
                  + 6 * m_total * D                    # complex product
                  + 4 * B_pad * D * D                  # inverse DFT (two D x D dots)
                  + 3 * B_pad * D),                    # normalization
        transcendentals=int(B_pad),                    # one rsqrt per row
        bytes_accessed=int((b1.size + b2.size
                            + w1.size + w2.size + w_cos.size + w_msin.size) * 2
                           + B_pad * D * 4),
    )

    kernel = functools.partial(bilinear_pooling_kernel, bt=BT, hw=HW)

    # NOTE: at D=128 all weights fit VMEM trivially even double-buffered; for
    # very large D the bf16 weights already halve the footprint (single-buffer
    # the grid-constant operands / raise vmem_limit_bytes if D ~ 2K on v7x).
    out = pl.pallas_call(
        kernel,
        out_shape=jax.ShapeDtypeStruct((B_pad, D), jnp.float32),
        grid_spec=pltpu.PrefetchScalarGridSpec(
            num_scalar_prefetch=0,
            grid=(B_pad // BT,),
            in_specs=[
                pl.BlockSpec((BT * HW, C1), lambda i: (i, 0)),
                pl.BlockSpec((BT * HW, C2), lambda i: (i, 0)),
                pl.BlockSpec((C1, 2 * D), lambda i: (0, 0)),
                pl.BlockSpec((C2, 2 * D), lambda i: (0, 0)),
                pl.BlockSpec((D, D), lambda i: (0, 0)),
                pl.BlockSpec((D, D), lambda i: (0, 0)),
            ],
            out_specs=pl.BlockSpec((BT, D), lambda i: (i, 0)),
        ),
        compiler_params=pltpu.CompilerParams(
            dimension_semantics=("parallel",)),
        cost_estimate=cost,
    )(b1, b2, w1, w2, w_cos, w_msin)

    out = out[:B]
    # Matches `output.squeeze()` in the reference module.
    return jnp.squeeze(out)


# ----------------------------------------------------------------------------
# Pure-JAX reference (uses jnp.fft, f32) for a correctness sanity check
# ----------------------------------------------------------------------------
def bilinear_pooling_ref(input1, input2, s1, s2, output_dim):
    B, C1, H, W = input1.shape
    _, C2, _, _ = input2.shape
    b1 = jnp.transpose(input1, (0, 2, 3, 1)).reshape(-1, C1)
    b2 = jnp.transpose(input2, (0, 2, 3, 1)).reshape(-1, C2)
    sk1 = b1 @ s1
    sk2 = b2 @ s2
    prod = jnp.fft.fft(sk1, axis=-1) * jnp.fft.fft(sk2, axis=-1)
    cbp_flat = jnp.real(jnp.fft.ifft(prod, axis=-1)) * output_dim
    cbp = cbp_flat.reshape(B, H, W, output_dim).sum(axis=(1, 2))
    norm = jnp.maximum(jnp.linalg.norm(cbp, axis=1, keepdims=True), 1e-12)
    return jnp.squeeze(cbp / norm)


if __name__ == "__main__":
    # Small shapes consistent with Bilinear_Pooling (num_feat1, num_feat2, num_feat_out)
    B, C1, C2, D, H, W = 2, 64, 32, 128, 4, 4

    w1, w2, w_cos, w_msin, s1, s2 = make_cbp_params(C1, C2, D)

    key = jax.random.PRNGKey(0)
    k1, k2 = jax.random.split(key)
    input1 = jax.random.normal(k1, (B, C1, H, W), dtype=jnp.float32)
    input2 = jax.random.normal(k2, (B, C2, H, W), dtype=jnp.float32)

    out = bilinear_pooling(input1, input2, w1, w2, w_cos, w_msin)
    out = jax.block_until_ready(out)

    ref = bilinear_pooling_ref(input1, input2, s1, s2, D)
    # bf16 MXU operands (f32 accumulation) -> compare at a bf16-appropriate tolerance.
    np.testing.assert_allclose(np.asarray(out), np.asarray(ref), rtol=2e-2, atol=2e-2)

    print("KERNEL_OK")
</pallas_src>

<mosaic_0001>
module attributes {stable_mosaic.version = 11 : i64} {
  func.func @bilinear_pooling_kernel(%arg0: i32, %arg1: memref<128x64xbf16, #tpu.memory_space<vmem>>, %arg2: memref<128x32xbf16, #tpu.memory_space<vmem>>, %arg3: memref<64x256xbf16, #tpu.memory_space<vmem>>, %arg4: memref<32x256xbf16, #tpu.memory_space<vmem>>, %arg5: memref<128x128xbf16, #tpu.memory_space<vmem>>, %arg6: memref<128x128xbf16, #tpu.memory_space<vmem>>, %arg7: memref<8x128xf32, #tpu.memory_space<vmem>>) attributes {dimension_semantics = [#tpu.dimension_semantics<parallel>], iteration_bounds = array<i64: 1>, scalar_prefetch = 0 : i64, scratch_operands = 0 : i64, tpu.core_type = #tpu.core_type<tc>, window_params = [{transform_indices = @transform_0, window_bounds = array<i64: 128, 64>}, {transform_indices = @transform_1, window_bounds = array<i64: 128, 32>}, {pipeline_mode = #tpu.pipeline_mode<synchronous>, transform_indices = @transform_2, window_bounds = array<i64: 64, 256>}, {pipeline_mode = #tpu.pipeline_mode<synchronous>, transform_indices = @transform_3, window_bounds = array<i64: 32, 256>}, {pipeline_mode = #tpu.pipeline_mode<synchronous>, transform_indices = @transform_4, window_bounds = array<i64: 128, 128>}, {pipeline_mode = #tpu.pipeline_mode<synchronous>, transform_indices = @transform_5, window_bounds = array<i64: 128, 128>}, {transform_indices = @transform_6, window_bounds = array<i64: 8, 128>}]} {
    %c0 = arith.constant 0 : index
    %c0_0 = arith.constant 0 : index
    %0 = vector.load %arg1[%c0, %c0_0] : memref<128x64xbf16, #tpu.memory_space<vmem>>, vector<128x64xbf16>
    %c0_1 = arith.constant 0 : index
    %c0_2 = arith.constant 0 : index
    %1 = vector.load %arg3[%c0_1, %c0_2] : memref<64x256xbf16, #tpu.memory_space<vmem>>, vector<64x256xbf16>
    %cst = arith.constant dense<0.000000e+00> : vector<128x256xf32>
    %2 = tpu.matmul %0, %1, %cst {dimension_numbers = #tpu.dot_dimension_numbers<[1], [0], [0], [1], [0, 0, 1, 1], [], []>} : vector<128x64xbf16>, vector<64x256xbf16>, vector<128x256xf32> -> vector<128x256xf32>
    %c0_3 = arith.constant 0 : index
    %c0_4 = arith.constant 0 : index
    %3 = vector.load %arg2[%c0_3, %c0_4] : memref<128x32xbf16, #tpu.memory_space<vmem>>, vector<128x32xbf16>
    %c0_5 = arith.constant 0 : index
    %c0_6 = arith.constant 0 : index
    %4 = vector.load %arg4[%c0_5, %c0_6] : memref<32x256xbf16, #tpu.memory_space<vmem>>, vector<32x256xbf16>
    %cst_7 = arith.constant dense<0.000000e+00> : vector<128x256xf32>
    %5 = tpu.matmul %3, %4, %cst_7 {dimension_numbers = #tpu.dot_dimension_numbers<[1], [0], [0], [1], [0, 0, 1, 1], [], []>} : vector<128x32xbf16>, vector<32x256xbf16>, vector<128x256xf32> -> vector<128x256xf32>
    %6 = vector.extract_strided_slice %2 {offsets = [0, 0], sizes = [128, 128], strides = [1, 1]} : vector<128x256xf32> to vector<128x128xf32>
    %7 = vector.extract_strided_slice %2 {offsets = [0, 128], sizes = [128, 128], strides = [1, 1]} : vector<128x256xf32> to vector<128x128xf32>
    %8 = vector.extract_strided_slice %5 {offsets = [0, 0], sizes = [128, 128], strides = [1, 1]} : vector<128x256xf32> to vector<128x128xf32>
    %9 = vector.extract_strided_slice %5 {offsets = [0, 128], sizes = [128, 128], strides = [1, 1]} : vector<128x256xf32> to vector<128x128xf32>
    %10 = arith.mulf %6, %8 : vector<128x128xf32>
    %11 = arith.mulf %7, %9 : vector<128x128xf32>
    %12 = arith.subf %10, %11 : vector<128x128xf32>
    %13 = arith.mulf %6, %9 : vector<128x128xf32>
    %14 = arith.mulf %7, %8 : vector<128x128xf32>
    %15 = arith.addf %13, %14 : vector<128x128xf32>
    %16 = vector.shape_cast %12 : vector<128x128xf32> to vector<8x16x128xf32>
    %cst_8 = arith.constant dense<0.000000e+00> : vector<8x128xf32>
    %17 = vector.multi_reduction <add>, %16, %cst_8 [1] : vector<8x16x128xf32> to vector<8x128xf32>
    %18 = vector.shape_cast %15 : vector<128x128xf32> to vector<8x16x128xf32>
    %cst_9 = arith.constant dense<0.000000e+00> : vector<8x128xf32>
    %19 = vector.multi_reduction <add>, %18, %cst_9 [1] : vector<8x16x128xf32> to vector<8x128xf32>
    %20 = arith.truncf %17 : vector<8x128xf32> to vector<8x128xbf16>
    %c0_10 = arith.constant 0 : index
    %c0_11 = arith.constant 0 : index
    %21 = vector.load %arg5[%c0_10, %c0_11] : memref<128x128xbf16, #tpu.memory_space<vmem>>, vector<128x128xbf16>
    %cst_12 = arith.constant dense<0.000000e+00> : vector<8x128xf32>
    %22 = tpu.matmul %20, %21, %cst_12 {dimension_numbers = #tpu.dot_dimension_numbers<[1], [0], [0], [1], [0, 0, 1, 1], [], []>} : vector<8x128xbf16>, vector<128x128xbf16>, vector<8x128xf32> -> vector<8x128xf32>
    %23 = arith.truncf %19 : vector<8x128xf32> to vector<8x128xbf16>
    %c0_13 = arith.constant 0 : index
    %c0_14 = arith.constant 0 : index
    %24 = vector.load %arg6[%c0_13, %c0_14] : memref<128x128xbf16, #tpu.memory_space<vmem>>, vector<128x128xbf16>
    %cst_15 = arith.constant dense<0.000000e+00> : vector<8x128xf32>
    %25 = tpu.matmul %23, %24, %cst_15 {dimension_numbers = #tpu.dot_dimension_numbers<[1], [0], [0], [1], [0, 0, 1, 1], [], []>} : vector<8x128xbf16>, vector<128x128xbf16>, vector<8x128xf32> -> vector<8x128xf32>
    %26 = arith.addf %22, %25 : vector<8x128xf32>
    %27 = arith.mulf %26, %26 : vector<8x128xf32>
    %cst_16 = arith.constant dense<0.000000e+00> : vector<8xf32>
    %28 = vector.multi_reduction <add>, %27, %cst_16 [1] : vector<8x128xf32> to vector<8xf32>
    %29 = vector.shape_cast %28 : vector<8xf32> to vector<8x1xf32>
    %cst_17 = arith.constant 1.000000e-24 : f32
    %30 = vector.broadcast %cst_17 : f32 to vector<8x1xf32>
    %31 = arith.maximumf %29, %30 : vector<8x1xf32>
    %32 = math.rsqrt %31 : vector<8x1xf32>
    %33 = vector.broadcast %32 : vector<8x1xf32> to vector<8x128xf32>
    %34 = arith.mulf %26, %33 : vector<8x128xf32>
    %c0_18 = arith.constant 0 : index
    %c0_19 = arith.constant 0 : index
    %35 = vector.load %arg7[%c0_18, %c0_19] : memref<8x128xf32, #tpu.memory_space<vmem>>, vector<8x128xf32>
    tpu.vector_store %arg7[%c0_18, %c0_19], %34 {strides = array<i32>} : memref<8x128xf32, #tpu.memory_space<vmem>>, vector<8x128xf32>,
    return
  }
  func.func @transform_0(%arg0: i32) -> (i32, i32) {
    %c0_i32 = arith.constant 0 : i32
    %c0_i32_0 = arith.constant 0 : i32
    return %arg0, %c0_i32 : i32, i32
  }
  func.func @transform_1(%arg0: i32) -> (i32, i32) {
    %c0_i32 = arith.constant 0 : i32
    %c0_i32_0 = arith.constant 0 : i32
    return %arg0, %c0_i32 : i32, i32
  }
  func.func @transform_2(%arg0: i32) -> (i32, i32) {
    %c0_i32 = arith.constant 0 : i32
    %c0_i32_0 = arith.constant 0 : i32
    %c0_i32_1 = arith.constant 0 : i32
    return %c0_i32, %c0_i32_0 : i32, i32
  }
  func.func @transform_3(%arg0: i32) -> (i32, i32) {
    %c0_i32 = arith.constant 0 : i32
    %c0_i32_0 = arith.constant 0 : i32
    %c0_i32_1 = arith.constant 0 : i32
    return %c0_i32, %c0_i32_0 : i32, i32
  }
  func.func @transform_4(%arg0: i32) -> (i32, i32) {
    %c0_i32 = arith.constant 0 : i32
    %c0_i32_0 = arith.constant 0 : i32
    %c0_i32_1 = arith.constant 0 : i32
    return %c0_i32, %c0_i32_0 : i32, i32
  }
  func.func @transform_5(%arg0: i32) -> (i32, i32) {
    %c0_i32 = arith.constant 0 : i32
    %c0_i32_0 = arith.constant 0 : i32
    %c0_i32_1 = arith.constant 0 : i32
    return %c0_i32, %c0_i32_0 : i32, i32
  }
  func.func @transform_6(%arg0: i32) -> (i32, i32) {
    %c0_i32 = arith.constant 0 : i32
    %c0_i32_0 = arith.constant 0 : i32
    return %arg0, %c0_i32 : i32, i32
  }
}

</mosaic_0001>

<llo_original>
// kernel: tpu_custom_call.1
$region0: #{tpu_custom_call.1}
  #allocation0 [shape = 'u32[]', space=smem, size = 0x4, offset = 0x4, fixed_abs, tag = 'smem constant byte address 0x4 - core index']
  #allocation1 [shape = 'u32[144,128]{1,0:T(1,128)}', space=vmem, size = 0x12000, scoped, tag = 'internal scratch']
  %s0 = inlined_call_operand.vmem [shape: bf16[128,64], index: 0, kind: input, shape index: {}]
  %s1 = inlined_call_operand.vmem [shape: bf16[128,32], index: 1, kind: input, shape index: {}]
  %s2 = inlined_call_operand.vmem [shape: bf16[64,256], index: 2, kind: input, shape index: {}]
  %s3 = inlined_call_operand.hbm [shape: bf16[32,256], index: 3, kind: input, shape index: {}]
  %s4 = inlined_call_operand.vmem [shape: bf16[128,128], index: 4, kind: input, shape index: {}]
  %s5 = inlined_call_operand.vmem [shape: bf16[128,128], index: 5, kind: input, shape index: {}]
  %s6 = inlined_call_operand.hbm [shape: f32[8,128], index: 6, kind: output, shape index: {}]
  %s7 = sld [smem:[#allocation0]]
  $region38: #{tpu_custom_call.1} parent=0
    _
  %s9 = ssub.s32 1, %s7
  %s10 = scalar_select 0, %s9, %s7
  $region1: #{tpu_custom_call.1} parent=0
    #allocation2 [shape = 'u8[16384]{0}', space=vmem, size = 0x4000, scoped, tag = 'input window, operand 3, single buffered']
    #allocation3 [shape = 's32[1]{0}', space=sflag, size = 0x4, scoped, tag = 'scoped memory for tpu_custom_call.1']
    #allocation4 [shape = 's32[1]{0}', space=sflag, size = 0x4, scoped, tag = 'scoped memory for tpu_custom_call.1']
    #allocation5 [shape = 'u8[4096]{0}', space=vmem, size = 0x1000, scoped, tag = 'output window, operand 0, single buffered']
    %11 = vsyncpa [#allocation3], 0
    %12 = vsyncpa [#allocation4], 0
    // Predicated region
    $region2: #{tpu_custom_call.1} parent=1 // pred_check
      _
    $region3: #{tpu_custom_call.1} parent=1 // pred_check_branch
      %14 = sbr.rel (0) target = $region5
    $region4: #{tpu_custom_call.1} parent=1 // pred_region
      _
    $region5: #{tpu_custom_call.1} parent=1 // pred_fallthru
      _
    // Predicated region
    $region6: #{tpu_custom_call.1} parent=1 // pred_check
      _
    $region7: #{tpu_custom_call.1} parent=1 // pred_check_branch
      %16 = sbr.rel (0) target = $region9
    $region8: #{tpu_custom_call.1} parent=1 // pred_region
      _
    $region9: #{tpu_custom_call.1} parent=1 // pred_fallthru
      _
    // Predicated region
    $region10: #{tpu_custom_call.1} parent=1 // pred_check
      _
    $region11: #{tpu_custom_call.1} parent=1 // pred_check_branch
      %18 = sbr.rel (0) target = $region13
    $region12: #{tpu_custom_call.1} parent=1 // pred_region
      _
    $region13: #{tpu_custom_call.1} parent=1 // pred_fallthru
      _
    // Predicated region
    $region14: #{tpu_custom_call.1} parent=1 // pred_check
      _
    $region15: #{tpu_custom_call.1} parent=1 // pred_check_branch
      %20 = sbr.rel (0) target = $region17
    $region16: #{tpu_custom_call.1} parent=1 // pred_region
      %s22 = ssub.s32 512, 512
      %23 = vsyncadd [#allocation3], %s22
      %s24 = sshll.u32 [#allocation2], 4
      %s25 = int_to_ptr.vmem [resolvable:$true] %s24
      %30 = dma.hbm_to_vmem [thread:$0]  %s3, 512, %s25, [#allocation3], 128, 128, 8
    $region17: #{tpu_custom_call.1} parent=1 // pred_fallthru
      _
    // Predicated region
    $region18: #{tpu_custom_call.1} parent=1 // pred_check
      _
    $region19: #{tpu_custom_call.1} parent=1 // pred_check_branch
      %32 = sbr.rel (0) target = $region21
    $region20: #{tpu_custom_call.1} parent=1 // pred_region
      _
    $region21: #{tpu_custom_call.1} parent=1 // pred_fallthru
      _
    // Predicated region
    $region22: #{tpu_custom_call.1} parent=1 // pred_check
      _
    $region23: #{tpu_custom_call.1} parent=1 // pred_check_branch
      %34 = sbr.rel (0) target = $region25
    $region24: #{tpu_custom_call.1} parent=1 // pred_region
      _
    $region25: #{tpu_custom_call.1} parent=1 // pred_fallthru
      _
    // Predicated region
    $region26: #{tpu_custom_call.1} parent=1 // pred_check
      _
    $region27: #{tpu_custom_call.1} parent=1 // pred_check_branch
      %36 = sbr.rel (0) target = $region29
    $region28: #{tpu_custom_call.1} parent=1 // pred_region
      %37 = dma.done [#allocation3], 512
    $region29: #{tpu_custom_call.1} parent=1 // pred_fallthru
      _
    %v39 = vld [vmem:[%s0] sm:$0xf]
    %v40 = vld [vmem:[%s0 + $0x4] sm:$0xf]
    %v41 = vld [vmem:[%s0 + $0x8] sm:$0xf]
    %v42 = vld [vmem:[%s0 + $0xc] sm:$0xf]
    %v43 = vld [vmem:[%s0 + $0x10] sm:$0xf]
    %v44 = vld [vmem:[%s0 + $0x14] sm:$0xf]
    %v45 = vld [vmem:[%s0 + $0x18] sm:$0xf]
    %v46 = vld [vmem:[%s0 + $0x1c] sm:$0xf]
    %v47 = vld [vmem:[%s0 + $0x20] sm:$0xf]
    %v48 = vld [vmem:[%s0 + $0x24] sm:$0xf]
    %v49 = vld [vmem:[%s0 + $0x28] sm:$0xf]
    %v50 = vld [vmem:[%s0 + $0x2c] sm:$0xf]
    %v51 = vld [vmem:[%s0 + $0x30] sm:$0xf]
    %v52 = vld [vmem:[%s0 + $0x34] sm:$0xf]
    %v53 = vld [vmem:[%s0 + $0x38] sm:$0xf]
    %v54 = vld [vmem:[%s0 + $0x3c] sm:$0xf]
    %v55 = vld [vmem:[%s2] sm:$0xff]
    %v56 = vld [vmem:[%s2 + $0x8] sm:$0xff]
    %v57 = vld [vmem:[%s2 + $0x10] sm:$0xff]
    %v58 = vld [vmem:[%s2 + $0x18] sm:$0xff]
    %v59 = vld [vmem:[%s2 + $0x20] sm:$0xff]
    %v60 = vld [vmem:[%s2 + $0x28] sm:$0xff]
    %v61 = vld [vmem:[%s2 + $0x30] sm:$0xff]
    %v62 = vld [vmem:[%s2 + $0x38] sm:$0xff]
    %v79 = vunpack.c.l.b16 %v39
    %v80 = vunpack.c.l.b16 %v40
    %v81 = vunpack.c.l.b16 %v41
    %v82 = vunpack.c.l.b16 %v42
    %v83 = vunpack.c.l.b16 %v43
    %v84 = vunpack.c.l.b16 %v44
    %v85 = vunpack.c.l.b16 %v45
    %v86 = vunpack.c.l.b16 %v46
    %v87 = vunpack.c.l.b16 %v47
    %v88 = vunpack.c.l.b16 %v48
    %v89 = vunpack.c.l.b16 %v49
    %v90 = vunpack.c.l.b16 %v50
    %v91 = vunpack.c.l.b16 %v51
    %v92 = vunpack.c.l.b16 %v52
    %v93 = vunpack.c.l.b16 %v53
    %v94 = vunpack.c.l.b16 %v54
    %v95 = vpack.c.b16 %v80, %v79
    %v96 = vpack.c.b16 %v82, %v81
    %v97 = vpack.c.b16 %v84, %v83
    %v98 = vpack.c.b16 %v86, %v85
    %v99 = vpack.c.b16 %v88, %v87
    %v100 = vpack.c.b16 %v90, %v89
    %v101 = vpack.c.b16 %v92, %v91
    %v102 = vpack.c.b16 %v94, %v93
    %v111 = vunpack.c.l.b16 %v55
    %v112 = vunpack.c.h.b16 %v55
    %v113 = vunpack.c.l.b16 %v56
    %v114 = vunpack.c.h.b16 %v56
    %v115 = vunpack.c.l.b16 %v57
    %v116 = vunpack.c.h.b16 %v57
    %v117 = vunpack.c.l.b16 %v58
    %v118 = vunpack.c.h.b16 %v58
    %v119 = vunpack.c.l.b16 %v59
    %v120 = vunpack.c.h.b16 %v59
    %v121 = vunpack.c.l.b16 %v60
    %v122 = vunpack.c.h.b16 %v60
    %v123 = vunpack.c.l.b16 %v61
    %v124 = vunpack.c.h.b16 %v61
    %v125 = vunpack.c.l.b16 %v62
    %v126 = vunpack.c.h.b16 %v62
    %v127 = vpack.c.b16 %v113, %v111
    %v128 = vpack.c.b16 %v114, %v112
    %v129 = vpack.c.b16 %v117, %v115
    %v130 = vpack.c.b16 %v118, %v116
    %v131 = vpack.c.b16 %v121, %v119
    %v132 = vpack.c.b16 %v122, %v120
    %v133 = vpack.c.b16 %v125, %v123
    %v134 = vpack.c.b16 %v126, %v124
    %vm143 = vcmask 523264
    %v145 = vsel %vm143, %v95, 0
    %v148 = vsel %vm143, %v96, 0
    %v151 = vsel %vm143, %v97, 0
    %v154 = vsel %vm143, %v98, 0
    %v157 = vsel %vm143, %v99, 0
    %v160 = vsel %vm143, %v100, 0
    %v163 = vsel %vm143, %v101, 0
    %v166 = vsel %vm143, %v102, 0
    %168 = vmatprep.subr.bf16.mxu0 %v128
    %169 = vmatpush1.bf16.msra.mxu0 %v127
    %170 = vmatprep.subr.bf16.mxu0 %v130
    %171 = vmatpush1.bf16.msra.mxu0 %v129
    %172 = vmatprep.subr.bf16.mxu0 %v132
    %173 = vmatpush1.bf16.msra.mxu0 %v131
    %174 = vmatprep.subr.bf16.mxu0 %v134
    %175 = vmatpush1.bf16.msra.mxu0 %v133
    %176 = vmatprep.subr.bf16.mxu0 0
    %177 = vmatpush1.bf16.msra.mxu0 0
    %178 = vmatprep.subr.bf16.mxu0 0
    %179 = vmatpush1.bf16.msra.mxu0 0
    %180 = vmatprep.subr.bf16.mxu0 0
    %181 = vmatpush1.bf16.msra.mxu0 0
    %182 = vmatprep.subr.bf16.mxu0 0
    %183 = vmatpush1.bf16.msra.mxu0 0
    %184 = vmatprep.subr.bf16.mxu0 0
    %185 = vmatpush1.bf16.msra.mxu0 0
    %186 = vmatprep.subr.bf16.mxu0 0
    %187 = vmatpush1.bf16.msra.mxu0 0
    %188 = vmatprep.subr.bf16.mxu0 0
    %189 = vmatpush1.bf16.msra.mxu0 0
    %190 = vmatprep.subr.bf16.mxu0 0
    %191 = vmatpush1.bf16.msra.mxu0 0
    %192 = vmatprep.subr.bf16.mxu0 0
    %193 = vmatpush1.bf16.msra.mxu0 0
    %194 = vmatprep.subr.bf16.mxu0 0
    %195 = vmatpush1.bf16.msra.mxu0 0
    %196 = vmatprep.subr.bf16.mxu0 0
    %197 = vmatpush1.bf16.msra.mxu0 0
    %198 = vmatprep.subr.bf16.mxu0 0
    %199 = vmatpush1.bf16.msra.mxu0 0
    %200 = vmatprep.mubr.bf16.mxu0 0
    %201 = vmatmul.mubr.bf16.gmra.mrb[0].mxu0 %v145
    %v202 = vpop.f32.mrb[0].mxu0
    %v203 = vadd.f32 0.0, %v202
    %v204 = vpop.f32.mrb[0].mxu0
    %v205 = vadd.f32 0.0, %v204
    %v206 = vpop.f32.mrb[0].mxu0
    %v207 = vadd.f32 0.0, %v206
    %v208 = vpop.f32.mrb[0].mxu0
    %v209 = vadd.f32 0.0, %v208
    %210 = vmatprep.mubr.bf16.mxu0 0
    %211 = vmatmul.mubr.bf16.gmra.mrb[0].mxu0 %v148
    %v212 = vpop.f32.mrb[0].mxu0
    %v213 = vadd.f32 0.0, %v212
    %v214 = vpop.f32.mrb[0].mxu0
    %v215 = vadd.f32 0.0, %v214
    %v216 = vpop.f32.mrb[0].mxu0
    %v217 = vadd.f32 0.0, %v216
    %v218 = vpop.f32.mrb[0].mxu0
    %v219 = vadd.f32 0.0, %v218
    %220 = vmatprep.mubr.bf16.mxu0 0
    %221 = vmatmul.mubr.bf16.gmra.mrb[0].mxu0 %v151
    %v222 = vpop.f32.mrb[0].mxu0
    %v223 = vadd.f32 0.0, %v222
    %v224 = vpop.f32.mrb[0].mxu0
    %v225 = vadd.f32 0.0, %v224
    %v226 = vpop.f32.mrb[0].mxu0
    %v227 = vadd.f32 0.0, %v226
    %v228 = vpop.f32.mrb[0].mxu0
    %v229 = vadd.f32 0.0, %v228
    %230 = vmatprep.mubr.bf16.mxu0 0
    %231 = vmatmul.mubr.bf16.gmra.mrb[0].mxu0 %v154
    %v232 = vpop.f32.mrb[0].mxu0
    %v233 = vadd.f32 0.0, %v232
    %v234 = vpop.f32.mrb[0].mxu0
    %v235 = vadd.f32 0.0, %v234
    %v236 = vpop.f32.mrb[0].mxu0
    %v237 = vadd.f32 0.0, %v236
    %v238 = vpop.f32.mrb[0].mxu0
    %v239 = vadd.f32 0.0, %v238
    %240 = vmatprep.mubr.bf16.mxu0 0
    %241 = vmatmul.mubr.bf16.gmra.mrb[0].mxu0 %v157
    %v242 = vpop.f32.mrb[0].mxu0
    %v243 = vadd.f32 0.0, %v242
    %v244 = vpop.f32.mrb[0].mxu0
    %v245 = vadd.f32 0.0, %v244
    %v246 = vpop.f32.mrb[0].mxu0
    %v247 = vadd.f32 0.0, %v246
    %v248 = vpop.f32.mrb[0].mxu0
    %v249 = vadd.f32 0.0, %v248
    %250 = vmatprep.mubr.bf16.mxu0 0
    %251 = vmatmul.mubr.bf16.gmra.mrb[0].mxu0 %v160
    %v252 = vpop.f32.mrb[0].mxu0
    %v253 = vadd.f32 0.0, %v252
    %v254 = vpop.f32.mrb[0].mxu0
    %v255 = vadd.f32 0.0, %v254
    %v256 = vpop.f32.mrb[0].mxu0
    %v257 = vadd.f32 0.0, %v256
    %v258 = vpop.f32.mrb[0].mxu0
    %v259 = vadd.f32 0.0, %v258
    %260 = vmatprep.mubr.bf16.mxu0 0
    %261 = vmatmul.mubr.bf16.gmra.mrb[0].mxu0 %v163
    %v262 = vpop.f32.mrb[0].mxu0
    %v263 = vadd.f32 0.0, %v262
    %v264 = vpop.f32.mrb[0].mxu0
    %v265 = vadd.f32 0.0, %v264
    %v266 = vpop.f32.mrb[0].mxu0
    %v267 = vadd.f32 0.0, %v266
    %v268 = vpop.f32.mrb[0].mxu0
    %v269 = vadd.f32 0.0, %v268
    %270 = vmatprep.mubr.bf16.mxu0 0
    %271 = vmatmul.mubr.bf16.gmra.mrb[0].mxu0 %v166
    %v272 = vpop.f32.mrb[0].mxu0
    %v273 = vadd.f32 0.0, %v272
    %v274 = vpop.f32.mrb[0].mxu0
    %v275 = vadd.f32 0.0, %v274
    %v276 = vpop.f32.mrb[0].mxu0
    %v277 = vadd.f32 0.0, %v276
    %v278 = vpop.f32.mrb[0].mxu0
    %v279 = vadd.f32 0.0, %v278
    %280 = vdwg.mxu0
    %v281 = vld [vmem:[%s1] sm:$0xf]
    %v282 = vld [vmem:[%s1 + $0x4] sm:$0xf]
    %v283 = vld [vmem:[%s1 + $0x8] sm:$0xf]
    %v284 = vld [vmem:[%s1 + $0xc] sm:$0xf]
    %v285 = vld [vmem:[%s1 + $0x10] sm:$0xf]
    %v286 = vld [vmem:[%s1 + $0x14] sm:$0xf]
    %v287 = vld [vmem:[%s1 + $0x18] sm:$0xf]
    %v288 = vld [vmem:[%s1 + $0x1c] sm:$0xf]
    %v289 = vld [vmem:[%s1 + $0x20] sm:$0xf]
    %v290 = vld [vmem:[%s1 + $0x24] sm:$0xf]
    %v291 = vld [vmem:[%s1 + $0x28] sm:$0xf]
    %v292 = vld [vmem:[%s1 + $0x2c] sm:$0xf]
    %v293 = vld [vmem:[%s1 + $0x30] sm:$0xf]
    %v294 = vld [vmem:[%s1 + $0x34] sm:$0xf]
    %v295 = vld [vmem:[%s1 + $0x38] sm:$0xf]
    %v296 = vld [vmem:[%s1 + $0x3c] sm:$0xf]
    %v297 = vld [vmem:[#allocation2] sm:$0xff]
    %v298 = vld [vmem:[#allocation2 + $0x8] sm:$0xff]
    %v299 = vld [vmem:[#allocation2 + $0x10] sm:$0xff]
    %v300 = vld [vmem:[#allocation2 + $0x18] sm:$0xff]
    %v317 = vunpack.c.l.b16 %v281
    %v318 = vunpack.c.l.b16 %v282
    %v319 = vunpack.c.l.b16 %v283
    %v320 = vunpack.c.l.b16 %v284
    %v321 = vunpack.c.l.b16 %v285
    %v322 = vunpack.c.l.b16 %v286
    %v323 = vunpack.c.l.b16 %v287
    %v324 = vunpack.c.l.b16 %v288
    %v325 = vunpack.c.l.b16 %v289
    %v326 = vunpack.c.l.b16 %v290
    %v327 = vunpack.c.l.b16 %v291
    %v328 = vunpack.c.l.b16 %v292
    %v329 = vunpack.c.l.b16 %v293
    %v330 = vunpack.c.l.b16 %v294
    %v331 = vunpack.c.l.b16 %v295
    %v332 = vunpack.c.l.b16 %v296
    %v333 = vpack.c.b16 %v318, %v317
    %v334 = vpack.c.b16 %v320, %v319
    %v335 = vpack.c.b16 %v322, %v321
    %v336 = vpack.c.b16 %v324, %v323
    %v337 = vpack.c.b16 %v326, %v325
    %v338 = vpack.c.b16 %v328, %v327
    %v339 = vpack.c.b16 %v330, %v329
    %v340 = vpack.c.b16 %v332, %v331
    %v345 = vunpack.c.l.b16 %v297
    %v346 = vunpack.c.h.b16 %v297
    %v347 = vunpack.c.l.b16 %v298
    %v348 = vunpack.c.h.b16 %v298
    %v349 = vunpack.c.l.b16 %v299
    %v350 = vunpack.c.h.b16 %v299
    %v351 = vunpack.c.l.b16 %v300
    %v352 = vunpack.c.h.b16 %v300
    %v353 = vpack.c.b16 %v347, %v345
    %v354 = vpack.c.b16 %v348, %v346
    %v355 = vpack.c.b16 %v351, %v349
    %v356 = vpack.c.b16 %v352, %v350
    %vm361 = vcmask 261120
    %v363 = vsel %vm361, %v333, 0
    %v366 = vsel %vm361, %v334, 0
    %v369 = vsel %vm361, %v335, 0
    %v372 = vsel %vm361, %v336, 0
    %v375 = vsel %vm361, %v337, 0
    %v378 = vsel %vm361, %v338, 0
    %v381 = vsel %vm361, %v339, 0
    %v384 = vsel %vm361, %v340, 0
    %386 = vmatprep.subr.bf16.mxu0 %v354
    %387 = vmatpush1.bf16.msra.mxu0 %v353
    %388 = vmatprep.subr.bf16.mxu0 %v356
    %389 = vmatpush1.bf16.msra.mxu0 %v355
    %390 = vmatprep.subr.bf16.mxu0 0
    %391 = vmatpush1.bf16.msra.mxu0 0
    %392 = vmatprep.subr.bf16.mxu0 0
    %393 = vmatpush1.bf16.msra.mxu0 0
    %394 = vmatprep.subr.bf16.mxu0 0
    %395 = vmatpush1.bf16.msra.mxu0 0
    %396 = vmatprep.subr.bf16.mxu0 0
    %397 = vmatpush1.bf16.msra.mxu0 0
    %398 = vmatprep.subr.bf16.mxu0 0
    %399 = vmatpush1.bf16.msra.mxu0 0
    %400 = vmatprep.subr.bf16.mxu0 0
    %401 = vmatpush1.bf16.msra.mxu0 0
    %402 = vmatprep.subr.bf16.mxu0 0
    %403 = vmatpush1.bf16.msra.mxu0 0
    %404 = vmatprep.subr.bf16.mxu0 0
    %405 = vmatpush1.bf16.msra.mxu0 0
    %406 = vmatprep.subr.bf16.mxu0 0
    %407 = vmatpush1.bf16.msra.mxu0 0
    %408 = vmatprep.subr.bf16.mxu0 0
    %409 = vmatpush1.bf16.msra.mxu0 0
    %410 = vmatprep.subr.bf16.mxu0 0
    %411 = vmatpush1.bf16.msra.mxu0 0
    %412 = vmatprep.subr.bf16.mxu0 0
    %413 = vmatpush1.bf16.msra.mxu0 0
    %414 = vmatprep.subr.bf16.mxu0 0
    %415 = vmatpush1.bf16.msra.mxu0 0
    %416 = vmatprep.subr.bf16.mxu0 0
    %417 = vmatpush1.bf16.msra.mxu0 0
    %418 = vmatprep.mubr.bf16.mxu0 0
    %419 = vmatmul.mubr.bf16.gmra.mrb[0].mxu0 %v363
    %v420 = vpop.f32.mrb[0].mxu0
    %v421 = vadd.f32 0.0, %v420
    %v422 = vpop.f32.mrb[0].mxu0
    %v423 = vadd.f32 0.0, %v422
    %v424 = vpop.f32.mrb[0].mxu0
    %v425 = vadd.f32 0.0, %v424
    %v426 = vpop.f32.mrb[0].mxu0
    %v427 = vadd.f32 0.0, %v426
    %428 = vmatprep.mubr.bf16.mxu0 0
    %429 = vmatmul.mubr.bf16.gmra.mrb[0].mxu0 %v366
    %v430 = vpop.f32.mrb[0].mxu0
    %v431 = vadd.f32 0.0, %v430
    %v432 = vpop.f32.mrb[0].mxu0
    %v433 = vadd.f32 0.0, %v432
    %v434 = vpop.f32.mrb[0].mxu0
    %v435 = vadd.f32 0.0, %v434
    %v436 = vpop.f32.mrb[0].mxu0
    %v437 = vadd.f32 0.0, %v436
    %438 = vmatprep.mubr.bf16.mxu0 0
    %439 = vmatmul.mubr.bf16.gmra.mrb[0].mxu0 %v369
    %v440 = vpop.f32.mrb[0].mxu0
    %v441 = vadd.f32 0.0, %v440
    %v442 = vpop.f32.mrb[0].mxu0
    %v443 = vadd.f32 0.0, %v442
    %v444 = vpop.f32.mrb[0].mxu0
    %v445 = vadd.f32 0.0, %v444
    %v446 = vpop.f32.mrb[0].mxu0
    %v447 = vadd.f32 0.0, %v446
    %448 = vmatprep.mubr.bf16.mxu0 0
    %449 = vmatmul.mubr.bf16.gmra.mrb[0].mxu0 %v372
    %v450 = vpop.f32.mrb[0].mxu0
    %v451 = vadd.f32 0.0, %v450
    %v452 = vpop.f32.mrb[0].mxu0
    %v453 = vadd.f32 0.0, %v452
    %v454 = vpop.f32.mrb[0].mxu0
    %v455 = vadd.f32 0.0, %v454
    %v456 = vpop.f32.mrb[0].mxu0
    %v457 = vadd.f32 0.0, %v456
    %458 = vmatprep.mubr.bf16.mxu0 0
    %459 = vmatmul.mubr.bf16.gmra.mrb[0].mxu0 %v375
    %v460 = vpop.f32.mrb[0].mxu0
    %v461 = vadd.f32 0.0, %v460
    %v462 = vpop.f32.mrb[0].mxu0
    %v463 = vadd.f32 0.0, %v462
    %v464 = vpop.f32.mrb[0].mxu0
    %v465 = vadd.f32 0.0, %v464
    %v466 = vpop.f32.mrb[0].mxu0
    %v467 = vadd.f32 0.0, %v466
    %468 = vmatprep.mubr.bf16.mxu0 0
    %469 = vmatmul.mubr.bf16.gmra.mrb[0].mxu0 %v378
    %v470 = vpop.f32.mrb[0].mxu0
    %v471 = vadd.f32 0.0, %v470
    %v472 = vpop.f32.mrb[0].mxu0
    %v473 = vadd.f32 0.0, %v472
    %v474 = vpop.f32.mrb[0].mxu0
    %v475 = vadd.f32 0.0, %v474
    %v476 = vpop.f32.mrb[0].mxu0
    %v477 = vadd.f32 0.0, %v476
    %478 = vmatprep.mubr.bf16.mxu0 0
    %479 = vmatmul.mubr.bf16.gmra.mrb[0].mxu0 %v381
    %v480 = vpop.f32.mrb[0].mxu0
    %v481 = vadd.f32 0.0, %v480
    %v482 = vpop.f32.mrb[0].mxu0
    %v483 = vadd.f32 0.0, %v482
    %v484 = vpop.f32.mrb[0].mxu0
    %v485 = vadd.f32 0.0, %v484
    %v486 = vpop.f32.mrb[0].mxu0
    %v487 = vadd.f32 0.0, %v486
    %488 = vmatprep.mubr.bf16.mxu0 0
    %489 = vmatmul.mubr.bf16.gmra.mrb[0].mxu0 %v384
    %v490 = vpop.f32.mrb[0].mxu0
    %v491 = vadd.f32 0.0, %v490
    %v492 = vpop.f32.mrb[0].mxu0
    %v493 = vadd.f32 0.0, %v492
    %v494 = vpop.f32.mrb[0].mxu0
    %v495 = vadd.f32 0.0, %v494
    %v496 = vpop.f32.mrb[0].mxu0
    %v497 = vadd.f32 0.0, %v496
    %498 = vdwg.mxu0
    %v499 = vmul.f32 %v203, %v421
    %v500 = vmul.f32 %v207, %v425
    %v501 = vmul.f32 %v213, %v431
    %v502 = vmul.f32 %v217, %v435
    %v503 = vmul.f32 %v223, %v441
    %v504 = vmul.f32 %v227, %v445
    %v505 = vmul.f32 %v233, %v451
    %v506 = vmul.f32 %v237, %v455
    %v507 = vmul.f32 %v243, %v461
    %v508 = vmul.f32 %v247, %v465
    %v509 = vmul.f32 %v253, %v471
    %v510 = vmul.f32 %v257, %v475
    %v511 = vmul.f32 %v263, %v481
    %v512 = vmul.f32 %v267, %v485
    %v513 = vmul.f32 %v273, %v491
    %v514 = vmul.f32 %v277, %v495
    %v515 = vmul.f32 %v205, %v423
    %v516 = vmul.f32 %v209, %v427
    %v517 = vmul.f32 %v215, %v433
    %v518 = vmul.f32 %v219, %v437
    %v519 = vmul.f32 %v225, %v443
    %v520 = vmul.f32 %v229, %v447
    %v521 = vmul.f32 %v235, %v453
    %v522 = vmul.f32 %v239, %v457
    %v523 = vmul.f32 %v245, %v463
    %v524 = vmul.f32 %v249, %v467
    %v525 = vmul.f32 %v255, %v473
    %v526 = vmul.f32 %v259, %v477
    %v527 = vmul.f32 %v265, %v483
    %v528 = vmul.f32 %v269, %v487
    %v529 = vmul.f32 %v275, %v493
    %v530 = vmul.f32 %v279, %v497
    %v531 = vsub.f32 %v499, %v515
    %v532 = vsub.f32 %v500, %v516
    %v533 = vsub.f32 %v501, %v517
    %v534 = vsub.f32 %v502, %v518
    %v535 = vsub.f32 %v503, %v519
    %v536 = vsub.f32 %v504, %v520
    %v537 = vsub.f32 %v505, %v521
    %v538 = vsub.f32 %v506, %v522
    %v539 = vsub.f32 %v507, %v523
    %v540 = vsub.f32 %v508, %v524
    %v541 = vsub.f32 %v509, %v525
    %v542 = vsub.f32 %v510, %v526
    %v543 = vsub.f32 %v511, %v527
    %v544 = vsub.f32 %v512, %v528
    %v545 = vsub.f32 %v513, %v529
    %v546 = vsub.f32 %v514, %v530
    %v547 = vmul.f32 %v203, %v423
    %v548 = vmul.f32 %v207, %v427
    %v549 = vmul.f32 %v213, %v433
    %v550 = vmul.f32 %v217, %v437
    %v551 = vmul.f32 %v223, %v443
    %v552 = vmul.f32 %v227, %v447
    %v553 = vmul.f32 %v233, %v453
    %v554 = vmul.f32 %v237, %v457
    %v555 = vmul.f32 %v243, %v463
    %v556 = vmul.f32 %v247, %v467
    %v557 = vmul.f32 %v253, %v473
    %v558 = vmul.f32 %v257, %v477
    %v559 = vmul.f32 %v263, %v483
    %v560 = vmul.f32 %v267, %v487
    %v561 = vmul.f32 %v273, %v493
    %v562 = vmul.f32 %v277, %v497
    %v563 = vmul.f32 %v205, %v421
    %v564 = vmul.f32 %v209, %v425
    %v565 = vmul.f32 %v215, %v431
    %v566 = vmul.f32 %v219, %v435
    %v567 = vmul.f32 %v225, %v441
    %v568 = vmul.f32 %v229, %v445
    %v569 = vmul.f32 %v235, %v451
    %v570 = vmul.f32 %v239, %v455
    %v571 = vmul.f32 %v245, %v461
    %v572 = vmul.f32 %v249, %v465
    %v573 = vmul.f32 %v255, %v471
    %v574 = vmul.f32 %v259, %v475
    %v575 = vmul.f32 %v265, %v481
    %v576 = vmul.f32 %v269, %v485
    %v577 = vmul.f32 %v275, %v491
    %v578 = vmul.f32 %v279, %v495
    %v579 = vadd.f32 %v547, %v563
    %v580 = vadd.f32 %v548, %v564
    %v581 = vadd.f32 %v549, %v565
    %v582 = vadd.f32 %v550, %v566
    %v583 = vadd.f32 %v551, %v567
    %v584 = vadd.f32 %v552, %v568
    %v585 = vadd.f32 %v553, %v569
    %v586 = vadd.f32 %v554, %v570
    %v587 = vadd.f32 %v555, %v571
    %v588 = vadd.f32 %v556, %v572
    %v589 = vadd.f32 %v557, %v573
    %v590 = vadd.f32 %v558, %v574
    %v591 = vadd.f32 %v559, %v575
    %v592 = vadd.f32 %v560, %v576
    %v593 = vadd.f32 %v561, %v577
    %v594 = vadd.f32 %v562, %v578
    %v595 = vadd.f32 %v531, %v532
    %v596 = vrot.slane %v595, 4
    %v597 = vadd.f32 %v595, %v596
    %v598 = vrot.slane %v597, 2
    %v599 = vadd.f32 %v597, %v598
    %v600 = vrot.slane %v599, 1
    %v601 = vadd.f32 %v599, %v600
    %v602 = vadd.f32 %v533, %v534
    %v603 = vrot.slane %v602, 4
    %v604 = vadd.f32 %v602, %v603
    %v605 = vrot.slane %v604, 2
    %v606 = vadd.f32 %v604, %v605
    %v607 = vrot.slane %v606, 1
    %v608 = vadd.f32 %v606, %v607
    %v609 = vadd.f32 %v535, %v536
    %v610 = vrot.slane %v609, 4
    %v611 = vadd.f32 %v609, %v610
    %v612 = vrot.slane %v611, 2
    %v613 = vadd.f32 %v611, %v612
    %v614 = vrot.slane %v613, 1
    %v615 = vadd.f32 %v613, %v614
    %v616 = vadd.f32 %v537, %v538
    %v617 = vrot.slane %v616, 4
    %v618 = vadd.f32 %v616, %v617
    %v619 = vrot.slane %v618, 2
    %v620 = vadd.f32 %v618, %v619
    %v621 = vrot.slane %v620, 1
    %v622 = vadd.f32 %v620, %v621
    %v623 = vadd.f32 %v539, %v540
    %v624 = vrot.slane %v623, 4
    %v625 = vadd.f32 %v623, %v624
    %v626 = vrot.slane %v625, 2
    %v627 = vadd.f32 %v625, %v626
    %v628 = vrot.slane %v627, 1
    %v629 = vadd.f32 %v627, %v628
    %v630 = vadd.f32 %v541, %v542
    %v631 = vrot.slane %v630, 4
    %v632 = vadd.f32 %v630, %v631
    %v633 = vrot.slane %v632, 2
    %v634 = vadd.f32 %v632, %v633
    %v635 = vrot.slane %v634, 1
    %v636 = vadd.f32 %v634, %v635
    %v637 = vadd.f32 %v543, %v544
    %v638 = vrot.slane %v637, 4
    %v639 = vadd.f32 %v637, %v638
    %v640 = vrot.slane %v639, 2
    %v641 = vadd.f32 %v639, %v640
    %v642 = vrot.slane %v641, 1
    %v643 = vadd.f32 %v641, %v642
    %v644 = vadd.f32 %v545, %v546
    %v645 = vrot.slane %v644, 4
    %v646 = vadd.f32 %v644, %v645
    %v647 = vrot.slane %v646, 2
    %v648 = vadd.f32 %v646, %v647
    %v649 = vrot.slane %v648, 1
    %v650 = vadd.f32 %v648, %v649
    %v651 = vadd.f32 %v579, %v580
    %v652 = vrot.slane %v651, 4
    %v653 = vadd.f32 %v651, %v652
    %v654 = vrot.slane %v653, 2
    %v655 = vadd.f32 %v653, %v654
    %v656 = vrot.slane %v655, 1
    %v657 = vadd.f32 %v655, %v656
    %v658 = vadd.f32 %v581, %v582
    %v659 = vrot.slane %v658, 4
    %v660 = vadd.f32 %v658, %v659
    %v661 = vrot.slane %v660, 2
    %v662 = vadd.f32 %v660, %v661
    %v663 = vrot.slane %v662, 1
    %v664 = vadd.f32 %v662, %v663
    %v665 = vadd.f32 %v583, %v584
    %v666 = vrot.slane %v665, 4
    %v667 = vadd.f32 %v665, %v666
    %v668 = vrot.slane %v667, 2
    %v669 = vadd.f32 %v667, %v668
    %v670 = vrot.slane %v669, 1
    %v671 = vadd.f32 %v669, %v670
    %v672 = vadd.f32 %v585, %v586
    %v673 = vrot.slane %v672, 4
    %v674 = vadd.f32 %v672, %v673
    %v675 = vrot.slane %v674, 2
    %v676 = vadd.f32 %v674, %v675
    %v677 = vrot.slane %v676, 1
    %v678 = vadd.f32 %v676, %v677
    %v679 = vadd.f32 %v587, %v588
    %v680 = vrot.slane %v679, 4
    %v681 = vadd.f32 %v679, %v680
    %v682 = vrot.slane %v681, 2
    %v683 = vadd.f32 %v681, %v682
    %v684 = vrot.slane %v683, 1
    %v685 = vadd.f32 %v683, %v684
    %v686 = vadd.f32 %v589, %v590
    %v687 = vrot.slane %v686, 4
    %v688 = vadd.f32 %v686, %v687
    %v689 = vrot.slane %v688, 2
    %v690 = vadd.f32 %v688, %v689
    %v691 = vrot.slane %v690, 1
    %v692 = vadd.f32 %v690, %v691
    %v693 = vadd.f32 %v591, %v592
    %v694 = vrot.slane %v693, 4
    %v695 = vadd.f32 %v693, %v694
    %v696 = vrot.slane %v695, 2
    %v697 = vadd.f32 %v695, %v696
    %v698 = vrot.slane %v697, 1
    %v699 = vadd.f32 %v697, %v698
    %v700 = vadd.f32 %v593, %v594
    %v701 = vrot.slane %v700, 4
    %v702 = vadd.f32 %v700, %v701
    %v703 = vrot.slane %v702, 2
    %v704 = vadd.f32 %v702, %v703
    %v705 = vrot.slane %v704, 1
    %v706 = vadd.f32 %v704, %v705
    %v707 = vpack.c.bf16 %v601, %v601
    %v708 = vpack.c.bf16 %v608, %v608
    %v709 = vpack.c.bf16 %v615, %v615
    %v710 = vpack.c.bf16 %v622, %v622
    %v711 = vpack.c.bf16 %v629, %v629
    %v712 = vpack.c.bf16 %v636, %v636
    %v713 = vpack.c.bf16 %v643, %v643
    %v714 = vpack.c.bf16 %v650, %v650
    %v715 = vld [vmem:[%s4] sm:$0xf]
    %v716 = vld [vmem:[%s4 + $0x4] sm:$0xf]
    %v717 = vld [vmem:[%s4 + $0x8] sm:$0xf]
    %v718 = vld [vmem:[%s4 + $0xc] sm:$0xf]
    %v719 = vld [vmem:[%s4 + $0x10] sm:$0xf]
    %v720 = vld [vmem:[%s4 + $0x14] sm:$0xf]
    %v721 = vld [vmem:[%s4 + $0x18] sm:$0xf]
    %v722 = vld [vmem:[%s4 + $0x1c] sm:$0xf]
    %v723 = vld [vmem:[%s4 + $0x20] sm:$0xf]
    %v724 = vld [vmem:[%s4 + $0x24] sm:$0xf]
    %v725 = vld [vmem:[%s4 + $0x28] sm:$0xf]
    %v726 = vld [vmem:[%s4 + $0x2c] sm:$0xf]
    %v727 = vld [vmem:[%s4 + $0x30] sm:$0xf]
    %v728 = vld [vmem:[%s4 + $0x34] sm:$0xf]
    %v729 = vld [vmem:[%s4 + $0x38] sm:$0xf]
    %v730 = vld [vmem:[%s4 + $0x3c] sm:$0xf]
    %v731 = vpack.c.bf16 %v657, %v657
    %v732 = vpack.c.bf16 %v664, %v664
    %v733 = vpack.c.bf16 %v671, %v671
    %v734 = vpack.c.bf16 %v678, %v678
    %v735 = vpack.c.bf16 %v685, %v685
    %v736 = vpack.c.bf16 %v692, %v692
    %v737 = vpack.c.bf16 %v699, %v699
    %v738 = vpack.c.bf16 %v706, %v706
    %v739 = vld [vmem:[%s5] sm:$0xf]
    %v740 = vld [vmem:[%s5 + $0x4] sm:$0xf]
    %v741 = vld [vmem:[%s5 + $0x8] sm:$0xf]
    %v742 = vld [vmem:[%s5 + $0xc] sm:$0xf]
    %v743 = vld [vmem:[%s5 + $0x10] sm:$0xf]
    %v744 = vld [vmem:[%s5 + $0x14] sm:$0xf]
    %v745 = vld [vmem:[%s5 + $0x18] sm:$0xf]
    %v746 = vld [vmem:[%s5 + $0x1c] sm:$0xf]
    %v747 = vld [vmem:[%s5 + $0x20] sm:$0xf]
    %v748 = vld [vmem:[%s5 + $0x24] sm:$0xf]
    %v749 = vld [vmem:[%s5 + $0x28] sm:$0xf]
    %v750 = vld [vmem:[%s5 + $0x2c] sm:$0xf]
    %v751 = vld [vmem:[%s5 + $0x30] sm:$0xf]
    %v752 = vld [vmem:[%s5 + $0x34] sm:$0xf]
    %v753 = vld [vmem:[%s5 + $0x38] sm:$0xf]
    %v754 = vld [vmem:[%s5 + $0x3c] sm:$0xf]
    %v763 = vunpack.c.l.b16 %v731
    %v764 = vunpack.c.l.b16 %v732
    %v765 = vunpack.c.l.b16 %v733
    %v766 = vunpack.c.l.b16 %v734
    %v767 = vunpack.c.l.b16 %v735
    %v768 = vunpack.c.l.b16 %v736
    %v769 = vunpack.c.l.b16 %v737
    %v770 = vunpack.c.l.b16 %v738
    %vm771 = vcmask 1041409
    %v772 = vsel %vm771, %v764, %v763
    %vm773 = vcmask 1042434
    %v774 = vsel %vm773, %v765, %v772
    %vm775 = vcmask 1043459
    %v776 = vsel %vm775, %v766, %v774
    %vm777 = vcmask 1044484
    %v778 = vsel %vm777, %v767, %v776
    %vm779 = vcmask 1045509
    %v780 = vsel %vm779, %v768, %v778
    %vm781 = vcmask 1046534
    %v782 = vsel %vm781, %v769, %v780
    %vm783 = vcmask 1047559
    %v784 = vsel %vm783, %v770, %v782
    %v785 = vpack.c.b16 %v784, %v784
    %v803 = vunpack.c.l.b16 %v739
    %v804 = vunpack.c.l.b16 %v740
    %v805 = vunpack.c.l.b16 %v741
    %v806 = vunpack.c.l.b16 %v742
    %v807 = vunpack.c.l.b16 %v743
    %v808 = vunpack.c.l.b16 %v744
    %v809 = vunpack.c.l.b16 %v745
    %v810 = vunpack.c.l.b16 %v746
    %v811 = vunpack.c.l.b16 %v747
    %v812 = vunpack.c.l.b16 %v748
    %v813 = vunpack.c.l.b16 %v749
    %v814 = vunpack.c.l.b16 %v750
    %v815 = vunpack.c.l.b16 %v751
    %v816 = vunpack.c.l.b16 %v752
    %v817 = vunpack.c.l.b16 %v753
    %v818 = vunpack.c.l.b16 %v754
    %v819 = vpack.c.b16 %v804, %v803
    %v820 = vpack.c.b16 %v806, %v805
    %v821 = vpack.c.b16 %v808, %v807
    %v822 = vpack.c.b16 %v810, %v809
    %v823 = vpack.c.b16 %v812, %v811
    %v824 = vpack.c.b16 %v814, %v813
    %v825 = vpack.c.b16 %v816, %v815
    %v826 = vpack.c.b16 %v818, %v817
    %835 = vmatprep.subr.bf16.mxu0 0
    %836 = vmatpush1.bf16.msra.mxu0 %v819
    %837 = vmatprep.subr.bf16.mxu0 0
    %838 = vmatpush1.bf16.msra.mxu0 %v820
    %839 = vmatprep.subr.bf16.mxu0 0
    %840 = vmatpush1.bf16.msra.mxu0 %v821
    %841 = vmatprep.subr.bf16.mxu0 0
    %842 = vmatpush1.bf16.msra.mxu0 %v822
    %843 = vmatprep.subr.bf16.mxu0 0
    %844 = vmatpush1.bf16.msra.mxu0 %v823
    %845 = vmatprep.subr.bf16.mxu0 0
    %846 = vmatpush1.bf16.msra.mxu0 %v824
    %847 = vmatprep.subr.bf16.mxu0 0
    %848 = vmatpush1.bf16.msra.mxu0 %v825
    %849 = vmatprep.subr.bf16.mxu0 0
    %850 = vmatpush1.bf16.msra.mxu0 %v826
    %851 = vmatprep.subr.bf16.mxu0 0
    %852 = vmatpush1.bf16.msra.mxu0 0
    %853 = vmatprep.subr.bf16.mxu0 0
    %854 = vmatpush1.bf16.msra.mxu0 0
    %855 = vmatprep.subr.bf16.mxu0 0
    %856 = vmatpush1.bf16.msra.mxu0 0
    %857 = vmatprep.subr.bf16.mxu0 0
    %858 = vmatpush1.bf16.msra.mxu0 0
    %859 = vmatprep.subr.bf16.mxu0 0
    %860 = vmatpush1.bf16.msra.mxu0 0
    %861 = vmatprep.subr.bf16.mxu0 0
    %862 = vmatpush1.bf16.msra.mxu0 0
    %863 = vmatprep.subr.bf16.mxu0 0
    %864 = vmatpush1.bf16.msra.mxu0 0
    %865 = vmatprep.subr.bf16.mxu0 0
    %866 = vmatpush1.bf16.msra.mxu0 0
    %867 = vmatprep.mubr.bf16.mxu0 0
    %868 = vmatmul.mubr.bf16.gmra.mrb[0].mxu0 %v785
    %v869 = vpop.f32.mrb[0].mxu0
    %v870 = vadd.f32 0.0, %v869
    %v871 = vpop.f32.mrb[0].mxu0
    %v872 = vpop.f32.mrb[0].mxu0
    %v873 = vpop.f32.mrb[0].mxu0
    %874 = vdwg.mxu0
    %v883 = vunpack.c.l.b16 %v707
    %v884 = vunpack.c.l.b16 %v708
    %v885 = vunpack.c.l.b16 %v709
    %v886 = vunpack.c.l.b16 %v710
    %v887 = vunpack.c.l.b16 %v711
    %v888 = vunpack.c.l.b16 %v712
    %v889 = vunpack.c.l.b16 %v713
    %v890 = vunpack.c.l.b16 %v714
    %v891 = vsel %vm771, %v884, %v883
    %v892 = vsel %vm773, %v885, %v891
    %v893 = vsel %vm775, %v886, %v892
    %v894 = vsel %vm777, %v887, %v893
    %v895 = vsel %vm779, %v888, %v894
    %v896 = vsel %vm781, %v889, %v895
    %v897 = vsel %vm783, %v890, %v896
    %v898 = vpack.c.b16 %v897, %v897
    %v916 = vunpack.c.l.b16 %v715
    %v917 = vunpack.c.l.b16 %v716
    %v918 = vunpack.c.l.b16 %v717
    %v919 = vunpack.c.l.b16 %v718
    %v920 = vunpack.c.l.b16 %v719
    %v921 = vunpack.c.l.b16 %v720
    %v922 = vunpack.c.l.b16 %v721
    %v923 = vunpack.c.l.b16 %v722
    %v924 = vunpack.c.l.b16 %v723
    %v925 = vunpack.c.l.b16 %v724
    %v926 = vunpack.c.l.b16 %v725
    %v927 = vunpack.c.l.b16 %v726
    %v928 = vunpack.c.l.b16 %v727
    %v929 = vunpack.c.l.b16 %v728
    %v930 = vunpack.c.l.b16 %v729
    %v931 = vunpack.c.l.b16 %v730
    %v932 = vpack.c.b16 %v917, %v916
    %v933 = vpack.c.b16 %v919, %v918
    %v934 = vpack.c.b16 %v921, %v920
    %v935 = vpack.c.b16 %v923, %v922
    %v936 = vpack.c.b16 %v925, %v924
    %v937 = vpack.c.b16 %v927, %v926
    %v938 = vpack.c.b16 %v929, %v928
    %v939 = vpack.c.b16 %v931, %v930
    %948 = vmatprep.subr.bf16.mxu0 0
    %949 = vmatpush1.bf16.msra.mxu0 %v932
    %950 = vmatprep.subr.bf16.mxu0 0
    %951 = vmatpush1.bf16.msra.mxu0 %v933
    %952 = vmatprep.subr.bf16.mxu0 0
    %953 = vmatpush1.bf16.msra.mxu0 %v934
    %954 = vmatprep.subr.bf16.mxu0 0
    %955 = vmatpush1.bf16.msra.mxu0 %v935
    %956 = vmatprep.subr.bf16.mxu0 0
    %957 = vmatpush1.bf16.msra.mxu0 %v936
    %958 = vmatprep.subr.bf16.mxu0 0
    %959 = vmatpush1.bf16.msra.mxu0 %v937
    %960 = vmatprep.subr.bf16.mxu0 0
    %961 = vmatpush1.bf16.msra.mxu0 %v938
    %962 = vmatprep.subr.bf16.mxu0 0
    %963 = vmatpush1.bf16.msra.mxu0 %v939
    %964 = vmatprep.subr.bf16.mxu0 0
    %965 = vmatpush1.bf16.msra.mxu0 0
    %966 = vmatprep.subr.bf16.mxu0 0
    %967 = vmatpush1.bf16.msra.mxu0 0
    %968 = vmatprep.subr.bf16.mxu0 0
    %969 = vmatpush1.bf16.msra.mxu0 0
    %970 = vmatprep.subr.bf16.mxu0 0
    %971 = vmatpush1.bf16.msra.mxu0 0
    %972 = vmatprep.subr.bf16.mxu0 0
    %973 = vmatpush1.bf16.msra.mxu0 0
    %974 = vmatprep.subr.bf16.mxu0 0
    %975 = vmatpush1.bf16.msra.mxu0 0
    %976 = vmatprep.subr.bf16.mxu0 0
    %977 = vmatpush1.bf16.msra.mxu0 0
    %978 = vmatprep.subr.bf16.mxu0 0
    %979 = vmatpush1.bf16.msra.mxu0 0
    %980 = vmatprep.mubr.bf16.mxu0 0
    %981 = vmatmul.mubr.bf16.gmra.mrb[0].mxu0 %v898
    %v982 = vpop.f32.mrb[0].mxu0
    %v983 = vadd.f32 %v870, %v982
    %v984 = vpop.f32.mrb[0].mxu0
    %v985 = vpop.f32.mrb[0].mxu0
    %v986 = vpop.f32.mrb[0].mxu0
    %987 = vdwg.mxu0
    %v988 = vmul.f32 %v983, %v983
    %989 = vadd.xlane.f32.xlu0 %v988
    %v990 = vpop.xlane.xlu0 %989
    %v991 = vmax.f32 %v990, 1e-24
    %v992 = vrsqrt.pop %v991
    %v993 = vmul.f32 %v983, %v992
    %994 = vst [vmem:[#allocation5] sm:$0xff] %v993
    // Predicated region
    $region30: #{tpu_custom_call.1} parent=1 // pred_check
      _
    $region31: #{tpu_custom_call.1} parent=1 // pred_check_branch
      %996 = sbr.rel (0) target = $region33
    $region32: #{tpu_custom_call.1} parent=1 // pred_region
      %s998 = ssub.s32 128, 128
      %999 = vsyncadd [#allocation4], %s998
      %s1001 = sshll.u32 [#allocation5], 4
      %s1002 = int_to_ptr.vmem [resolvable:$true] %s1001
      %1004 = dma.vmem_to_hbm [thread:$0]  %s1002, 128, %s6, [#allocation4]
    $region33: #{tpu_custom_call.1} parent=1 // pred_fallthru
      _
    // Predicated region
    $region34: #{tpu_custom_call.1} parent=1 // pred_check
      _
    $region35: #{tpu_custom_call.1} parent=1 // pred_check_branch
      %1006 = sbr.rel (0) target = $region37
    $region36: #{tpu_custom_call.1} parent=1 // pred_region
      %1007 = dma.done [#allocation4], 128
    $region37: #{tpu_custom_call.1} parent=1 // pred_fallthru
      _
    %1008 = vsyncpa [#allocation3], 1
    %1009 = vsyncpa [#allocation4], 1

</llo_original>
